<compile_context>
chip_gen: v7x
topology: tpu7x:2x2x1
jax: 0.10.0
libtpu: 0.0.40
codegen_flags: <defaults>
</compile_context>

<pallas_src>
import functools

import jax
import jax.numpy as jnp
from jax.experimental import pallas as pl
from jax.experimental.pallas import tpu as pltpu

NUM_CLASSES = 5
PADDED_CLASSES = 8   # narrow, lane-masked output block (full-array last dim)
NEG_BIG = -1e30      # padded-class bias (f32) -> exp() underflows to 0


def _mlp_kernel(x_ref,
                w1_ref, b1_ref,
                w2_ref, b2_ref,
                w3_ref, b3_ref,
                w4_ref, b4_ref,
                o_ref):
    """One (TM, 16) batch tile: 4 matmuls + 3 ReLUs + softmax, fully fused.

    Matmul operands are bf16; accumulation and all elementwise math are f32.
    """
    # Cast to bf16 in-kernel (avoids a separate pad/cast HBM pass in the wrapper).
    x = x_ref[...].astype(jnp.bfloat16)                           # (TM, 16)

    # dense_1: (TM,16) @ (16,64) + (1,64) -> ReLU
    h = jnp.dot(x, w1_ref[...], preferred_element_type=jnp.float32) + b1_ref[...]
    h = jnp.maximum(h, 0.0).astype(jnp.bfloat16)

    # dense_2: (TM,64) @ (64,32) + (1,32) -> ReLU
    h = jnp.dot(h, w2_ref[...], preferred_element_type=jnp.float32) + b2_ref[...]
    h = jnp.maximum(h, 0.0).astype(jnp.bfloat16)

    # dense_3: (TM,32) @ (32,32) + (1,32) -> ReLU
    h = jnp.dot(h, w3_ref[...], preferred_element_type=jnp.float32) + b3_ref[...]
    h = jnp.maximum(h, 0.0).astype(jnp.bfloat16)

    # dense_4 (padded to 8 classes): (TM,32) @ (32,8) + (1,8)
    logits = jnp.dot(h, w4_ref[...], preferred_element_type=jnp.float32) + b4_ref[...]

    # Softmax over the padded class axis; padded logits are ~-1e30 -> exp == 0,
    # so they contribute nothing to the denominator.
    m = jnp.max(logits, axis=1, keepdims=True)
    e = jnp.exp(logits - m)
    denom = jnp.sum(e, axis=1, keepdims=True)
    o_ref[...] = (e / denom).astype(o_ref.dtype)  # exact divide: rows sum to 1


@functools.partial(jax.jit, static_argnames=("tm",))
def three_layer_mlp(x, params, *, tm=4096):
    """x: (B, 16) float32. params: transposed (in,out) weights + (1,out) biases."""
    B = x.shape[0]
    assert tm % 8 == 0, "tm must be a multiple of 8"

    # Small batches: use a single full-array block (no padding needed).
    # Large batches: (tm, 16) tiles; the last, possibly partial tile is handled
    # by Pallas' out-of-bounds write masking.
    tm_eff = tm if B >= tm else B
    num_tiles = pl.cdiv(B, tm_eff)

    # bf16 matmul operands (tiny; cast cost negligible), f32 biases.
    w1 = params["w1"].astype(jnp.bfloat16)
    w2 = params["w2"].astype(jnp.bfloat16)
    w3 = params["w3"].astype(jnp.bfloat16)
    b1, b2, b3 = params["b1"], params["b2"], params["b3"]

    # Final layer padded to 8 output columns; padded bias -> exp() == 0.
    w4 = jnp.pad(params["w4"], ((0, 0), (0, PADDED_CLASSES - NUM_CLASSES))
                 ).astype(jnp.bfloat16)
    b4 = jnp.pad(params["b4"], ((0, 0), (0, PADDED_CLASSES - NUM_CLASSES)),
                 constant_values=NEG_BIG).astype(jnp.float32)

    resident = lambda shape: pl.BlockSpec(shape, lambda i: (0, 0))

    out_padded = pl.pallas_call(
        _mlp_kernel,
        # Option (a) from the review: jnp.bfloat16 here halves output DMA again.
        out_shape=jax.ShapeDtypeStruct((B, PADDED_CLASSES), jnp.float32),
        grid=(num_tiles,),
        in_specs=[
            pl.BlockSpec((tm_eff, 16), lambda i: (i, 0)),  # x: streamed per tile (f32)
            resident(w1.shape), resident(b1.shape),        # weights/biases: VMEM-resident
            resident(w2.shape), resident(b2.shape),
            resident(w3.shape), resident(b3.shape),
            resident(w4.shape), resident(b4.shape),
        ],
        out_specs=pl.BlockSpec((tm_eff, PADDED_CLASSES), lambda i: (i, 0)),
        compiler_params=pltpu.CompilerParams(
            dimension_semantics=("parallel",)),
    )(x, w1, b1, w2, b2, w3, b3, w4, b4)

    return out_padded[:, :NUM_CLASSES]


def init_params(key):
    """Deterministic init mimicking nn.Linear's U(-1/sqrt(fan_in), 1/sqrt(fan_in)).

    Weights stored as (in_features, out_features) — transposed vs. PyTorch.
    Biases stored as (1, out_features) for lane-aligned broadcast in-kernel.
    """
    dims = [(16, 64), (64, 32), (32, 32), (32, NUM_CLASSES)]
    params = {}
    for i, (fan_in, fan_out) in enumerate(dims, start=1):
        key, kw, kb = jax.random.split(key, 3)
        bound = 1.0 / jnp.sqrt(float(fan_in))
        params[f"w{i}"] = jax.random.uniform(
            kw, (fan_in, fan_out), jnp.float32, -bound, bound)
        params[f"b{i}"] = jax.random.uniform(
            kb, (1, fan_out), jnp.float32, -bound, bound)
    return params


def reference_forward(x, params):
    """Pure-JAX f32 reference for correctness checking."""
    h = jnp.maximum(x @ params["w1"] + params["b1"], 0.0)
    h = jnp.maximum(h @ params["w2"] + params["b2"], 0.0)
    h = jnp.maximum(h @ params["w3"] + params["b3"], 0.0)
    logits = h @ params["w4"] + params["b4"]
    return jax.nn.softmax(logits, axis=1)


if __name__ == "__main__":
    key = jax.random.PRNGKey(0)
    key, kx = jax.random.split(key)

    B = 8  # small batch; single full-array block (tm_eff = B)
    x = jax.random.normal(kx, (B, 16), jnp.float32)
    params = init_params(key)

    out = three_layer_mlp(x, params)
    out = jax.block_until_ready(out)

    ref = reference_forward(x, params)
    assert out.shape == (B, NUM_CLASSES), out.shape
    # bf16 matmul operands -> relaxed tolerance vs the f32 reference.
    assert jnp.allclose(out, ref, atol=2e-2, rtol=2e-2), "mismatch vs reference"
    # Exact divide in the kernel: softmax rows sum to 1 at f32 precision.
    assert jnp.allclose(jnp.sum(out, axis=1), jnp.ones((B,)), atol=1e-3)

    print("KERNEL_OK")
</pallas_src>

<mosaic_0001>
module attributes {stable_mosaic.version = 11 : i64} {
  func.func @_mlp_kernel(%arg0: i32, %arg1: memref<8x16xf32, #tpu.memory_space<vmem>>, %arg2: memref<16x64xbf16, #tpu.memory_space<vmem>>, %arg3: memref<1x64xf32, #tpu.memory_space<vmem>>, %arg4: memref<64x32xbf16, #tpu.memory_space<vmem>>, %arg5: memref<1x32xf32, #tpu.memory_space<vmem>>, %arg6: memref<32x32xbf16, #tpu.memory_space<vmem>>, %arg7: memref<1x32xf32, #tpu.memory_space<vmem>>, %arg8: memref<32x8xbf16, #tpu.memory_space<vmem>>, %arg9: memref<1x8xf32, #tpu.memory_space<vmem>>, %arg10: memref<8x8xf32, #tpu.memory_space<vmem>>) attributes {dimension_semantics = [#tpu.dimension_semantics<parallel>], iteration_bounds = array<i64: 1>, scalar_prefetch = 0 : i64, scratch_operands = 0 : i64, tpu.core_type = #tpu.core_type<tc>, window_params = [{transform_indices = @transform_0, window_bounds = array<i64: 8, 16>}, {pipeline_mode = #tpu.pipeline_mode<synchronous>, transform_indices = @transform_1, window_bounds = array<i64: 16, 64>}, {pipeline_mode = #tpu.pipeline_mode<synchronous>, transform_indices = @transform_2, window_bounds = array<i64: 1, 64>}, {pipeline_mode = #tpu.pipeline_mode<synchronous>, transform_indices = @transform_3, window_bounds = array<i64: 64, 32>}, {pipeline_mode = #tpu.pipeline_mode<synchronous>, transform_indices = @transform_4, window_bounds = array<i64: 1, 32>}, {pipeline_mode = #tpu.pipeline_mode<synchronous>, transform_indices = @transform_5, window_bounds = array<i64: 32, 32>}, {pipeline_mode = #tpu.pipeline_mode<synchronous>, transform_indices = @transform_6, window_bounds = array<i64: 1, 32>}, {pipeline_mode = #tpu.pipeline_mode<synchronous>, transform_indices = @transform_7, window_bounds = array<i64: 32, 8>}, {pipeline_mode = #tpu.pipeline_mode<synchronous>, transform_indices = @transform_8, window_bounds = array<i64: 1, 8>}, {transform_indices = @transform_9, window_bounds = array<i64: 8, 8>}]} {
    %c0 = arith.constant 0 : index
    %c0_0 = arith.constant 0 : index
    %0 = vector.load %arg1[%c0, %c0_0] : memref<8x16xf32, #tpu.memory_space<vmem>>, vector<8x16xf32>
    %1 = arith.truncf %0 : vector<8x16xf32> to vector<8x16xbf16>
    %c0_1 = arith.constant 0 : index
    %c0_2 = arith.constant 0 : index
    %2 = vector.load %arg2[%c0_1, %c0_2] : memref<16x64xbf16, #tpu.memory_space<vmem>>, vector<16x64xbf16>
    %cst = arith.constant dense<0.000000e+00> : vector<8x64xf32>
    %3 = tpu.matmul %1, %2, %cst {dimension_numbers = #tpu.dot_dimension_numbers<[1], [0], [0], [1], [0, 0, 1, 1], [], []>} : vector<8x16xbf16>, vector<16x64xbf16>, vector<8x64xf32> -> vector<8x64xf32>
    %c0_3 = arith.constant 0 : index
    %c0_4 = arith.constant 0 : index
    %4 = vector.load %arg3[%c0_3, %c0_4] : memref<1x64xf32, #tpu.memory_space<vmem>>, vector<1x64xf32>
    %5 = vector.broadcast %4 : vector<1x64xf32> to vector<8x64xf32>
    %6 = arith.addf %3, %5 : vector<8x64xf32>
    %cst_5 = arith.constant 0.000000e+00 : f32
    %7 = vector.broadcast %cst_5 : f32 to vector<8x64xf32>
    %8 = arith.maximumf %6, %7 : vector<8x64xf32>
    %9 = arith.truncf %8 : vector<8x64xf32> to vector<8x64xbf16>
    %c0_6 = arith.constant 0 : index
    %c0_7 = arith.constant 0 : index
    %10 = vector.load %arg4[%c0_6, %c0_7] : memref<64x32xbf16, #tpu.memory_space<vmem>>, vector<64x32xbf16>
    %cst_8 = arith.constant dense<0.000000e+00> : vector<8x32xf32>
    %11 = tpu.matmul %9, %10, %cst_8 {dimension_numbers = #tpu.dot_dimension_numbers<[1], [0], [0], [1], [0, 0, 1, 1], [], []>} : vector<8x64xbf16>, vector<64x32xbf16>, vector<8x32xf32> -> vector<8x32xf32>
    %c0_9 = arith.constant 0 : index
    %c0_10 = arith.constant 0 : index
    %12 = vector.load %arg5[%c0_9, %c0_10] : memref<1x32xf32, #tpu.memory_space<vmem>>, vector<1x32xf32>
    %13 = vector.broadcast %12 : vector<1x32xf32> to vector<8x32xf32>
    %14 = arith.addf %11, %13 : vector<8x32xf32>
    %cst_11 = arith.constant 0.000000e+00 : f32
    %15 = vector.broadcast %cst_11 : f32 to vector<8x32xf32>
    %16 = arith.maximumf %14, %15 : vector<8x32xf32>
    %17 = arith.truncf %16 : vector<8x32xf32> to vector<8x32xbf16>
    %c0_12 = arith.constant 0 : index
    %c0_13 = arith.constant 0 : index
    %18 = vector.load %arg6[%c0_12, %c0_13] : memref<32x32xbf16, #tpu.memory_space<vmem>>, vector<32x32xbf16>
    %cst_14 = arith.constant dense<0.000000e+00> : vector<8x32xf32>
    %19 = tpu.matmul %17, %18, %cst_14 {dimension_numbers = #tpu.dot_dimension_numbers<[1], [0], [0], [1], [0, 0, 1, 1], [], []>} : vector<8x32xbf16>, vector<32x32xbf16>, vector<8x32xf32> -> vector<8x32xf32>
    %c0_15 = arith.constant 0 : index
    %c0_16 = arith.constant 0 : index
    %20 = vector.load %arg7[%c0_15, %c0_16] : memref<1x32xf32, #tpu.memory_space<vmem>>, vector<1x32xf32>
    %21 = vector.broadcast %20 : vector<1x32xf32> to vector<8x32xf32>
    %22 = arith.addf %19, %21 : vector<8x32xf32>
    %cst_17 = arith.constant 0.000000e+00 : f32
    %23 = vector.broadcast %cst_17 : f32 to vector<8x32xf32>
    %24 = arith.maximumf %22, %23 : vector<8x32xf32>
    %25 = arith.truncf %24 : vector<8x32xf32> to vector<8x32xbf16>
    %c0_18 = arith.constant 0 : index
    %c0_19 = arith.constant 0 : index
    %26 = vector.load %arg8[%c0_18, %c0_19] : memref<32x8xbf16, #tpu.memory_space<vmem>>, vector<32x8xbf16>
    %cst_20 = arith.constant dense<0.000000e+00> : vector<8x8xf32>
    %27 = tpu.matmul %25, %26, %cst_20 {dimension_numbers = #tpu.dot_dimension_numbers<[1], [0], [0], [1], [0, 0, 1, 1], [], []>} : vector<8x32xbf16>, vector<32x8xbf16>, vector<8x8xf32> -> vector<8x8xf32>
    %c0_21 = arith.constant 0 : index
    %c0_22 = arith.constant 0 : index
    %28 = vector.load %arg9[%c0_21, %c0_22] : memref<1x8xf32, #tpu.memory_space<vmem>>, vector<1x8xf32>
    %29 = vector.broadcast %28 : vector<1x8xf32> to vector<8x8xf32>
    %30 = arith.addf %27, %29 : vector<8x8xf32>
    %cst_23 = arith.constant dense<0xFF800000> : vector<8xf32>
    %31 = vector.multi_reduction <maximumf>, %30, %cst_23 [1] : vector<8x8xf32> to vector<8xf32>
    %32 = vector.shape_cast %31 : vector<8xf32> to vector<8x1xf32>
    %33 = vector.broadcast %32 : vector<8x1xf32> to vector<8x8xf32>
    %34 = arith.subf %30, %33 : vector<8x8xf32>
    %35 = math.exp %34 : vector<8x8xf32>
    %cst_24 = arith.constant dense<0.000000e+00> : vector<8xf32>
    %36 = vector.multi_reduction <add>, %35, %cst_24 [1] : vector<8x8xf32> to vector<8xf32>
    %37 = vector.shape_cast %36 : vector<8xf32> to vector<8x1xf32>
    %38 = vector.broadcast %37 : vector<8x1xf32> to vector<8x8xf32>
    %39 = arith.divf %35, %38 : vector<8x8xf32>
    %c0_25 = arith.constant 0 : index
    %c0_26 = arith.constant 0 : index
    %40 = vector.load %arg10[%c0_25, %c0_26] : memref<8x8xf32, #tpu.memory_space<vmem>>, vector<8x8xf32>
    tpu.vector_store %arg10[%c0_25, %c0_26], %39 {strides = array<i32>} : memref<8x8xf32, #tpu.memory_space<vmem>>, vector<8x8xf32>,
    return
  }
  func.func @transform_0(%arg0: i32) -> (i32, i32) {
    %c0_i32 = arith.constant 0 : i32
    %c0_i32_0 = arith.constant 0 : i32
    return %arg0, %c0_i32 : i32, i32
  }
  func.func @transform_1(%arg0: i32) -> (i32, i32) {
    %c0_i32 = arith.constant 0 : i32
    %c0_i32_0 = arith.constant 0 : i32
    %c0_i32_1 = arith.constant 0 : i32
    return %c0_i32, %c0_i32_0 : i32, i32
  }
  func.func @transform_2(%arg0: i32) -> (i32, i32) {
    %c0_i32 = arith.constant 0 : i32
    %c0_i32_0 = arith.constant 0 : i32
    %c0_i32_1 = arith.constant 0 : i32
    return %c0_i32, %c0_i32_0 : i32, i32
  }
  func.func @transform_3(%arg0: i32) -> (i32, i32) {
    %c0_i32 = arith.constant 0 : i32
    %c0_i32_0 = arith.constant 0 : i32
    %c0_i32_1 = arith.constant 0 : i32
    return %c0_i32, %c0_i32_0 : i32, i32
  }
  func.func @transform_4(%arg0: i32) -> (i32, i32) {
    %c0_i32 = arith.constant 0 : i32
    %c0_i32_0 = arith.constant 0 : i32
    %c0_i32_1 = arith.constant 0 : i32
    return %c0_i32, %c0_i32_0 : i32, i32
  }
  func.func @transform_5(%arg0: i32) -> (i32, i32) {
    %c0_i32 = arith.constant 0 : i32
    %c0_i32_0 = arith.constant 0 : i32
    %c0_i32_1 = arith.constant 0 : i32
    return %c0_i32, %c0_i32_0 : i32, i32
  }
  func.func @transform_6(%arg0: i32) -> (i32, i32) {
    %c0_i32 = arith.constant 0 : i32
    %c0_i32_0 = arith.constant 0 : i32
    %c0_i32_1 = arith.constant 0 : i32
    return %c0_i32, %c0_i32_0 : i32, i32
  }
  func.func @transform_7(%arg0: i32) -> (i32, i32) {
    %c0_i32 = arith.constant 0 : i32
    %c0_i32_0 = arith.constant 0 : i32
    %c0_i32_1 = arith.constant 0 : i32
    return %c0_i32, %c0_i32_0 : i32, i32
  }
  func.func @transform_8(%arg0: i32) -> (i32, i32) {
    %c0_i32 = arith.constant 0 : i32
    %c0_i32_0 = arith.constant 0 : i32
    %c0_i32_1 = arith.constant 0 : i32
    return %c0_i32, %c0_i32_0 : i32, i32
  }
  func.func @transform_9(%arg0: i32) -> (i32, i32) {
    %c0_i32 = arith.constant 0 : i32
    %c0_i32_0 = arith.constant 0 : i32
    return %arg0, %c0_i32 : i32, i32
  }
}

</mosaic_0001>

<llo_original>
// kernel: three_layer_mlp.1
$region0: #{three_layer_mlp.1}
  #allocation0 [shape = 'u32[]', space=smem, size = 0x4, offset = 0x4, fixed_abs, tag = 'smem constant byte address 0x4 - core index']
  #allocation1 [shape = 'u32[144,128]{1,0:T(1,128)}', space=vmem, size = 0x12000, scoped, tag = 'internal scratch']
  %s0 = inlined_call_operand.vmem [shape: f32[8,16], index: 0, kind: input, shape index: {}]
  %s1 = inlined_call_operand.vmem [shape: bf16[16,64], index: 1, kind: input, shape index: {}]
  %s2 = inlined_call_operand.vmem [shape: f32[1,64], index: 2, kind: input, shape index: {}]
  %s3 = inlined_call_operand.vmem [shape: bf16[64,32], index: 3, kind: input, shape index: {}]
  %s4 = inlined_call_operand.vmem [shape: f32[1,32], index: 4, kind: input, shape index: {}]
  %s5 = inlined_call_operand.vmem [shape: bf16[32,32], index: 5, kind: input, shape index: {}]
  %s6 = inlined_call_operand.vmem [shape: f32[1,32], index: 6, kind: input, shape index: {}]
  %s7 = inlined_call_operand.vmem [shape: bf16[32,8], index: 7, kind: input, shape index: {}]
  %s8 = inlined_call_operand.vmem [shape: f32[1,8], index: 8, kind: input, shape index: {}]
  %s9 = inlined_call_operand.hbm [shape: f32[8,8], index: 9, kind: output, shape index: {}]
  %s10 = sld [smem:[#allocation0]]
  $region46: #{three_layer_mlp.1} parent=0
    _
  %s12 = ssub.s32 1, %s10
  %s13 = scalar_select 0, %s12, %s10
  $region1: #{three_layer_mlp.1} parent=0
    #allocation2 [shape = 'u8[4096]{0}', space=vmem, size = 0x1000, scoped, tag = 'output window, operand 0, single buffered']
    #allocation3 [shape = 's32[1]{0}', space=sflag, size = 0x4, scoped, tag = 'scoped memory for three_layer_mlp.1']
    %14 = vsyncpa [#allocation3], 0
    // Predicated region
    $region2: #{three_layer_mlp.1} parent=1 // pred_check
      _
    $region3: #{three_layer_mlp.1} parent=1 // pred_check_branch
      %16 = sbr.rel (0) target = $region5
    $region4: #{three_layer_mlp.1} parent=1 // pred_region
      _
    $region5: #{three_layer_mlp.1} parent=1 // pred_fallthru
      _
    // Predicated region
    $region6: #{three_layer_mlp.1} parent=1 // pred_check
      _
    $region7: #{three_layer_mlp.1} parent=1 // pred_check_branch
      %18 = sbr.rel (0) target = $region9
    $region8: #{three_layer_mlp.1} parent=1 // pred_region
      _
    $region9: #{three_layer_mlp.1} parent=1 // pred_fallthru
      _
    // Predicated region
    $region10: #{three_layer_mlp.1} parent=1 // pred_check
      _
    $region11: #{three_layer_mlp.1} parent=1 // pred_check_branch
      %20 = sbr.rel (0) target = $region13
    $region12: #{three_layer_mlp.1} parent=1 // pred_region
      _
    $region13: #{three_layer_mlp.1} parent=1 // pred_fallthru
      _
    // Predicated region
    $region14: #{three_layer_mlp.1} parent=1 // pred_check
      _
    $region15: #{three_layer_mlp.1} parent=1 // pred_check_branch
      %22 = sbr.rel (0) target = $region17
    $region16: #{three_layer_mlp.1} parent=1 // pred_region
      _
    $region17: #{three_layer_mlp.1} parent=1 // pred_fallthru
      _
    // Predicated region
    $region18: #{three_layer_mlp.1} parent=1 // pred_check
      _
    $region19: #{three_layer_mlp.1} parent=1 // pred_check_branch
      %24 = sbr.rel (0) target = $region21
    $region20: #{three_layer_mlp.1} parent=1 // pred_region
      _
    $region21: #{three_layer_mlp.1} parent=1 // pred_fallthru
      _
    // Predicated region
    $region22: #{three_layer_mlp.1} parent=1 // pred_check
      _
    $region23: #{three_layer_mlp.1} parent=1 // pred_check_branch
      %26 = sbr.rel (0) target = $region25
    $region24: #{three_layer_mlp.1} parent=1 // pred_region
      _
    $region25: #{three_layer_mlp.1} parent=1 // pred_fallthru
      _
    // Predicated region
    $region26: #{three_layer_mlp.1} parent=1 // pred_check
      _
    $region27: #{three_layer_mlp.1} parent=1 // pred_check_branch
      %28 = sbr.rel (0) target = $region29
    $region28: #{three_layer_mlp.1} parent=1 // pred_region
      _
    $region29: #{three_layer_mlp.1} parent=1 // pred_fallthru
      _
    // Predicated region
    $region30: #{three_layer_mlp.1} parent=1 // pred_check
      _
    $region31: #{three_layer_mlp.1} parent=1 // pred_check_branch
      %30 = sbr.rel (0) target = $region33
    $region32: #{three_layer_mlp.1} parent=1 // pred_region
      _
    $region33: #{three_layer_mlp.1} parent=1 // pred_fallthru
      _
    // Predicated region
    $region34: #{three_layer_mlp.1} parent=1 // pred_check
      _
    $region35: #{three_layer_mlp.1} parent=1 // pred_check_branch
      %32 = sbr.rel (0) target = $region37
    $region36: #{three_layer_mlp.1} parent=1 // pred_region
      _
    $region37: #{three_layer_mlp.1} parent=1 // pred_fallthru
      _
    %v34 = vld [vmem:[%s0] sm:$0xff]
    %v35 = vpack.c.bf16 %v34, %v34
    %v36 = vld [vmem:[%s1] sm:$0xf]
    %v37 = vld [vmem:[%s1 + $0x4] sm:$0xf]
    %v38 = vld [vmem:[%s2] sm:$0x1]
    %v40 = vlaneseq
    %v41 = vshrl.u32 %v40, 7
    %v42 = vsub.s32 0, %v41
    %v43 = vrot.slane %v38, %v42
    %v47 = vunpack.c.l.b16 %v36
    %v48 = vunpack.c.l.b16 %v37
    %v49 = vpack.c.b16 %v48, %v47
    %vm51 = vcmask 130048
    %v53 = vsel %vm51, %v35, 0
    %55 = vmatprep.subr.bf16.mxu0 0
    %56 = vmatpush1.bf16.msra.mxu0 %v49
    %57 = vmatprep.subr.bf16.mxu0 0
    %58 = vmatpush1.bf16.msra.mxu0 0
    %59 = vmatprep.subr.bf16.mxu0 0
    %60 = vmatpush1.bf16.msra.mxu0 0
    %61 = vmatprep.subr.bf16.mxu0 0
    %62 = vmatpush1.bf16.msra.mxu0 0
    %63 = vmatprep.subr.bf16.mxu0 0
    %64 = vmatpush1.bf16.msra.mxu0 0
    %65 = vmatprep.subr.bf16.mxu0 0
    %66 = vmatpush1.bf16.msra.mxu0 0
    %67 = vmatprep.subr.bf16.mxu0 0
    %68 = vmatpush1.bf16.msra.mxu0 0
    %69 = vmatprep.subr.bf16.mxu0 0
    %70 = vmatpush1.bf16.msra.mxu0 0
    %71 = vmatprep.subr.bf16.mxu0 0
    %72 = vmatpush1.bf16.msra.mxu0 0
    %73 = vmatprep.subr.bf16.mxu0 0
    %74 = vmatpush1.bf16.msra.mxu0 0
    %75 = vmatprep.subr.bf16.mxu0 0
    %76 = vmatpush1.bf16.msra.mxu0 0
    %77 = vmatprep.subr.bf16.mxu0 0
    %78 = vmatpush1.bf16.msra.mxu0 0
    %79 = vmatprep.subr.bf16.mxu0 0
    %80 = vmatpush1.bf16.msra.mxu0 0
    %81 = vmatprep.subr.bf16.mxu0 0
    %82 = vmatpush1.bf16.msra.mxu0 0
    %83 = vmatprep.subr.bf16.mxu0 0
    %84 = vmatpush1.bf16.msra.mxu0 0
    %85 = vmatprep.subr.bf16.mxu0 0
    %86 = vmatpush1.bf16.msra.mxu0 0
    %87 = vmatprep.mubr.bf16.mxu0 0
    %88 = vmatmul.mubr.bf16.gmra.mrb[0].mxu0 %v53
    %v89 = vpop.f32.mrb[0].mxu0
    %v90 = vadd.f32 %v43, %v89
    %v91 = vpop.f32.mrb[0].mxu0
    %v92 = vpop.f32.mrb[0].mxu0
    %v93 = vpop.f32.mrb[0].mxu0
    %94 = vdwg.mxu0
    %v95 = vmax.f32 %v90, 0.0
    %v96 = vpack.c.bf16 %v95, %v95
    %v97 = vld [vmem:[%s3] sm:$0xf]
    %v98 = vld [vmem:[%s3 + $0x4] sm:$0xf]
    %v99 = vld [vmem:[%s3 + $0x8] sm:$0xf]
    %v100 = vld [vmem:[%s3 + $0xc] sm:$0xf]
    %v101 = vld [vmem:[%s3 + $0x10] sm:$0xf]
    %v102 = vld [vmem:[%s3 + $0x14] sm:$0xf]
    %v103 = vld [vmem:[%s3 + $0x18] sm:$0xf]
    %v104 = vld [vmem:[%s3 + $0x1c] sm:$0xf]
    %v105 = vld [vmem:[%s4] sm:$0x1]
    %v107 = vlaneseq
    %v108 = vshrl.u32 %v107, 7
    %v109 = vsub.s32 0, %v108
    %v110 = vrot.slane %v105, %v109
    %v120 = vunpack.c.l.b16 %v97
    %v121 = vunpack.c.l.b16 %v98
    %v122 = vunpack.c.l.b16 %v99
    %v123 = vunpack.c.l.b16 %v100
    %v124 = vunpack.c.l.b16 %v101
    %v125 = vunpack.c.l.b16 %v102
    %v126 = vunpack.c.l.b16 %v103
    %v127 = vunpack.c.l.b16 %v104
    %v128 = vpack.c.b16 %v121, %v120
    %v129 = vpack.c.b16 %v123, %v122
    %v130 = vpack.c.b16 %v125, %v124
    %v131 = vpack.c.b16 %v127, %v126
    %vm136 = vcmask 523264
    %v138 = vsel %vm136, %v96, 0
    %140 = vmatprep.subr.bf16.mxu0 0
    %141 = vmatpush1.bf16.msra.mxu0 %v128
    %142 = vmatprep.subr.bf16.mxu0 0
    %143 = vmatpush1.bf16.msra.mxu0 %v129
    %144 = vmatprep.subr.bf16.mxu0 0
    %145 = vmatpush1.bf16.msra.mxu0 %v130
    %146 = vmatprep.subr.bf16.mxu0 0
    %147 = vmatpush1.bf16.msra.mxu0 %v131
    %148 = vmatprep.subr.bf16.mxu0 0
    %149 = vmatpush1.bf16.msra.mxu0 0
    %150 = vmatprep.subr.bf16.mxu0 0
    %151 = vmatpush1.bf16.msra.mxu0 0
    %152 = vmatprep.subr.bf16.mxu0 0
    %153 = vmatpush1.bf16.msra.mxu0 0
    %154 = vmatprep.subr.bf16.mxu0 0
    %155 = vmatpush1.bf16.msra.mxu0 0
    %156 = vmatprep.subr.bf16.mxu0 0
    %157 = vmatpush1.bf16.msra.mxu0 0
    %158 = vmatprep.subr.bf16.mxu0 0
    %159 = vmatpush1.bf16.msra.mxu0 0
    %160 = vmatprep.subr.bf16.mxu0 0
    %161 = vmatpush1.bf16.msra.mxu0 0
    %162 = vmatprep.subr.bf16.mxu0 0
    %163 = vmatpush1.bf16.msra.mxu0 0
    %164 = vmatprep.subr.bf16.mxu0 0
    %165 = vmatpush1.bf16.msra.mxu0 0
    %166 = vmatprep.subr.bf16.mxu0 0
    %167 = vmatpush1.bf16.msra.mxu0 0
    %168 = vmatprep.subr.bf16.mxu0 0
    %169 = vmatpush1.bf16.msra.mxu0 0
    %170 = vmatprep.subr.bf16.mxu0 0
    %171 = vmatpush1.bf16.msra.mxu0 0
    %172 = vmatprep.mubr.bf16.mxu0 0
    %173 = vmatmul.mubr.bf16.gmra.mrb[0].mxu0 %v138
    %v174 = vpop.f32.mrb[0].mxu0
    %v175 = vadd.f32 %v110, %v174
    %v176 = vpop.f32.mrb[0].mxu0
    %v177 = vpop.f32.mrb[0].mxu0
    %v178 = vpop.f32.mrb[0].mxu0
    %179 = vdwg.mxu0
    %v180 = vmax.f32 %v175, 0.0
    %v181 = vpack.c.bf16 %v180, %v180
    %v182 = vld [vmem:[%s5] sm:$0xf]
    %v183 = vld [vmem:[%s5 + $0x4] sm:$0xf]
    %v184 = vld [vmem:[%s5 + $0x8] sm:$0xf]
    %v185 = vld [vmem:[%s5 + $0xc] sm:$0xf]
    %v186 = vld [vmem:[%s6] sm:$0x1]
    %v188 = vlaneseq
    %v189 = vshrl.u32 %v188, 7
    %v190 = vsub.s32 0, %v189
    %v191 = vrot.slane %v186, %v190
    %v197 = vunpack.c.l.b16 %v182
    %v198 = vunpack.c.l.b16 %v183
    %v199 = vunpack.c.l.b16 %v184
    %v200 = vunpack.c.l.b16 %v185
    %v201 = vpack.c.b16 %v198, %v197
    %v202 = vpack.c.b16 %v200, %v199
    %vm205 = vcmask 261120
    %v207 = vsel %vm205, %v181, 0
    %209 = vmatprep.subr.bf16.mxu0 0
    %210 = vmatpush1.bf16.msra.mxu0 %v201
    %211 = vmatprep.subr.bf16.mxu0 0
    %212 = vmatpush1.bf16.msra.mxu0 %v202
    %213 = vmatprep.subr.bf16.mxu0 0
    %214 = vmatpush1.bf16.msra.mxu0 0
    %215 = vmatprep.subr.bf16.mxu0 0
    %216 = vmatpush1.bf16.msra.mxu0 0
    %217 = vmatprep.subr.bf16.mxu0 0
    %218 = vmatpush1.bf16.msra.mxu0 0
    %219 = vmatprep.subr.bf16.mxu0 0
    %220 = vmatpush1.bf16.msra.mxu0 0
    %221 = vmatprep.subr.bf16.mxu0 0
    %222 = vmatpush1.bf16.msra.mxu0 0
    %223 = vmatprep.subr.bf16.mxu0 0
    %224 = vmatpush1.bf16.msra.mxu0 0
    %225 = vmatprep.subr.bf16.mxu0 0
    %226 = vmatpush1.bf16.msra.mxu0 0
    %227 = vmatprep.subr.bf16.mxu0 0
    %228 = vmatpush1.bf16.msra.mxu0 0
    %229 = vmatprep.subr.bf16.mxu0 0
    %230 = vmatpush1.bf16.msra.mxu0 0
    %231 = vmatprep.subr.bf16.mxu0 0
    %232 = vmatpush1.bf16.msra.mxu0 0
    %233 = vmatprep.subr.bf16.mxu0 0
    %234 = vmatpush1.bf16.msra.mxu0 0
    %235 = vmatprep.subr.bf16.mxu0 0
    %236 = vmatpush1.bf16.msra.mxu0 0
    %237 = vmatprep.subr.bf16.mxu0 0
    %238 = vmatpush1.bf16.msra.mxu0 0
    %239 = vmatprep.subr.bf16.mxu0 0
    %240 = vmatpush1.bf16.msra.mxu0 0
    %241 = vmatprep.mubr.bf16.mxu0 0
    %242 = vmatmul.mubr.bf16.gmra.mrb[0].mxu0 %v207
    %v243 = vpop.f32.mrb[0].mxu0
    %v244 = vadd.f32 %v191, %v243
    %v245 = vpop.f32.mrb[0].mxu0
    %v246 = vpop.f32.mrb[0].mxu0
    %v247 = vpop.f32.mrb[0].mxu0
    %248 = vdwg.mxu0
    %v249 = vmax.f32 %v244, 0.0
    %v250 = vpack.c.bf16 %v249, %v249
    %v251 = vld [vmem:[%s7] sm:$0xf]
    %v252 = vld [vmem:[%s7 + $0x4] sm:$0xf]
    %v253 = vld [vmem:[%s7 + $0x8] sm:$0xf]
    %v254 = vld [vmem:[%s7 + $0xc] sm:$0xf]
    %v255 = vld [vmem:[%s8] sm:$0x1]
    %v257 = vlaneseq
    %v258 = vshrl.u32 %v257, 7
    %v259 = vsub.s32 0, %v258
    %v260 = vrot.slane %v255, %v259
    %v266 = vunpack.c.l.b16 %v251
    %v267 = vunpack.c.l.b16 %v252
    %v268 = vunpack.c.l.b16 %v253
    %v269 = vunpack.c.l.b16 %v254
    %v270 = vpack.c.b16 %v267, %v266
    %v271 = vpack.c.b16 %v269, %v268
    %v275 = vsel %vm205, %v250, 0
    %277 = vmatprep.subr.bf16.mxu0 0
    %278 = vmatpush1.bf16.msra.mxu0 %v270
    %279 = vmatprep.subr.bf16.mxu0 0
    %280 = vmatpush1.bf16.msra.mxu0 %v271
    %281 = vmatprep.subr.bf16.mxu0 0
    %282 = vmatpush1.bf16.msra.mxu0 0
    %283 = vmatprep.subr.bf16.mxu0 0
    %284 = vmatpush1.bf16.msra.mxu0 0
    %285 = vmatprep.subr.bf16.mxu0 0
    %286 = vmatpush1.bf16.msra.mxu0 0
    %287 = vmatprep.subr.bf16.mxu0 0
    %288 = vmatpush1.bf16.msra.mxu0 0
    %289 = vmatprep.subr.bf16.mxu0 0
    %290 = vmatpush1.bf16.msra.mxu0 0
    %291 = vmatprep.subr.bf16.mxu0 0
    %292 = vmatpush1.bf16.msra.mxu0 0
    %293 = vmatprep.subr.bf16.mxu0 0
    %294 = vmatpush1.bf16.msra.mxu0 0
    %295 = vmatprep.subr.bf16.mxu0 0
    %296 = vmatpush1.bf16.msra.mxu0 0
    %297 = vmatprep.subr.bf16.mxu0 0
    %298 = vmatpush1.bf16.msra.mxu0 0
    %299 = vmatprep.subr.bf16.mxu0 0
    %300 = vmatpush1.bf16.msra.mxu0 0
    %301 = vmatprep.subr.bf16.mxu0 0
    %302 = vmatpush1.bf16.msra.mxu0 0
    %303 = vmatprep.subr.bf16.mxu0 0
    %304 = vmatpush1.bf16.msra.mxu0 0
    %305 = vmatprep.subr.bf16.mxu0 0
    %306 = vmatpush1.bf16.msra.mxu0 0
    %307 = vmatprep.subr.bf16.mxu0 0
    %308 = vmatpush1.bf16.msra.mxu0 0
    %309 = vmatprep.mubr.bf16.mxu0 0
    %310 = vmatmul.mubr.bf16.gmra.mrb[0].mxu0 %v275
    %v311 = vpop.f32.mrb[0].mxu0
    %v312 = vadd.f32 %v260, %v311
    %v313 = vpop.f32.mrb[0].mxu0
    %v314 = vpop.f32.mrb[0].mxu0
    %v315 = vpop.f32.mrb[0].mxu0
    %316 = vdwg.mxu0
    %vm317 = vcmask 64512
    %v318 = vsel %vm317, %v312, -inf
    %319 = vmax.xlane.f32.xlu0 %v318
    %v320 = vpop.xlane.xlu0 %319
    %v321 = vsub.f32 %v312, %v320
    %v322 = vmul.f32 %v321, 1.442695
    %v323 = vpow.pop %v322
    %v324 = vsel %vm317, %v323, 0.0
    %325 = vadd.xlane.f32.xlu0 %v324
    %v326 = vpop.xlane.xlu0 %325
    %v327 = vrcp.pop %v326
    %v328 = vmul.f32 %v323, %v327
    %329 = vst.msk [vmem:[#allocation2] sm:$0xff] %vm317, %v328
    // Predicated region
    $region38: #{three_layer_mlp.1} parent=1 // pred_check
      _
    $region39: #{three_layer_mlp.1} parent=1 // pred_check_branch
      %331 = sbr.rel (0) target = $region41
    $region40: #{three_layer_mlp.1} parent=1 // pred_region
      %s333 = ssub.s32 128, 128
      %334 = vsyncadd [#allocation3], %s333
      %s336 = sshll.u32 [#allocation2], 4
      %s337 = int_to_ptr.vmem [resolvable:$true] %s336
      %339 = dma.vmem_to_hbm [thread:$0]  %s337, 128, %s9, [#allocation3]
    $region41: #{three_layer_mlp.1} parent=1 // pred_fallthru
      _
    // Predicated region
    $region42: #{three_layer_mlp.1} parent=1 // pred_check
      _
    $region43: #{three_layer_mlp.1} parent=1 // pred_check_branch
      %341 = sbr.rel (0) target = $region45
    $region44: #{three_layer_mlp.1} parent=1 // pred_region
      %342 = dma.done [#allocation3], 128
    $region45: #{three_layer_mlp.1} parent=1 // pred_fallthru
      _
    %343 = vsyncpa [#allocation3], 1

</llo_original>
